<compile_context>
chip_gen: v6e
topology: v6e:2x2x1
jax: 0.10.0
libtpu: 0.0.40
codegen_flags: <defaults>
</compile_context>

<pallas_src>
import functools

import jax
import jax.numpy as jnp
from jax import lax
from jax.experimental import pallas as pl
from jax.experimental.pallas import tpu as pltpu


def _round_up(x, m):
    return ((x + m - 1) // m) * m


# ----------------------------- Pallas kernel -----------------------------

def _double_tt_kernel(idx_ref, cores_ref, out_ref, *, mu, d, r, n_grid,
                      n_models, share_mask, block_offs, r_half):
    """Fused one-hot MXU gather for all models/coordinates + TT contraction.

    idx_ref   : (d, TB) int32   nearest-grid indices, batch on the lane axis
    cores_ref : (2*r_half, d*N) bf16
                block-diagonal stacked, boundary-folded TT cores of ALL models
                and coordinates; top half = bf16 hi, bottom half = bf16 lo
                (hi + lo ~= original f32 values).
    out_ref   : (1, TB) f32     blended output values
    """
    tb = idx_ref.shape[1]
    ids = idx_ref[...]                                          # (d, TB) int32

    # Block one-hot selector (one (N, TB) block per coordinate, stacked along
    # sublanes):  oh[k*N + n, b] = (idx[k, b] == n).  Exact in bf16.
    iota_n = lax.broadcasted_iota(jnp.int32, (n_grid, tb), 0)
    oh = jnp.concatenate(
        [(ids[k:k + 1, :] == iota_n).astype(jnp.float32) for k in range(d)],
        axis=0).astype(jnp.bfloat16)                            # (d*N, TB)

    # ONE MXU call gathers every core column of every model & coordinate:
    #   g2[row, b] = stacked[row, k(row)*N + idx_{k(row)}[b]]
    # (row padding to MXU group sizes is left to the compiler.)
    g2 = jnp.dot(cores_ref[...], oh,
                 preferred_element_type=jnp.float32)            # (2*r_half, TB)
    gathered = g2[:r_half] + g2[r_half:]                        # hi + lo -> ~f32

    # TT chain contraction per model.  The multiply rides the VPU and the
    # sublane reduce rides the XLU, both of which have slack while the MXU is
    # the saturated slot -> effectively free filler (per review, keep as-is).
    vals = []
    for m in range(n_models):
        offs = block_offs[m]
        # v[j, b] = (a^T G_0[:, idx_0[b], :])[j]
        v = gathered[offs[0]:offs[0] + r]                       # (r, TB)
        for k in range(d - 2):
            o = offs[1 + k]
            slab = gathered[o:o + r * r].reshape(r, r, tb)      # (j, i, TB)
            # v_new[j, b] = sum_i v[i, b] * G_{k+1}[i, idx_{k+1}[b], j]
            v = jnp.sum(slab * v[None, :, :], axis=1)           # (r, TB)
        o = offs[d - 1]
        last = gathered[o:o + r]                                # (r, TB)
        vals.append(jnp.sum(v * last, axis=0, keepdims=True))   # (1, TB)

    vals_inner, vals_outer = vals[0], vals[1]
    D = vals_outer if share_mask else vals[2]
    # Arithmetic blend (not jnp.where) to match the reference's
    # vi*mask + vo*~mask semantics, including non-finite propagation.
    m_f = (jnp.abs(D) < mu).astype(jnp.float32)
    out_ref[...] = vals_inner * m_f + vals_outer * (1.0 - m_f)


# ----------------------------- JAX glue -----------------------------

def _prep_model_blocks(model, d, r, n_grid):
    """Fold boundary vectors into the end cores; one (rows_k, N) block per coordinate.

    head[j, n]        = sum_i a[i] G_0[i, n, j]
    mid_k[j*r + i, n] = G_k[i, n, j]              (k = 1 .. d-2)
    tail[i, n]        = sum_j G_{d-1}[i, n, j] b[j]
    """
    cores = model["cores"].astype(jnp.float32)                  # (d, r, N, r)
    a = model["a"].astype(jnp.float32)                          # (r,)
    b = model["b"].astype(jnp.float32)                          # (r,)
    blocks = [jnp.einsum("i,inj->jn", a, cores[0])]             # (r, N)
    for k in range(1, d - 1):
        blocks.append(jnp.transpose(cores[k], (2, 0, 1)).reshape(r * r, n_grid))
    blocks.append(jnp.einsum("inj,j->in", cores[d - 1], b))     # (r, N)
    return blocks


def _build_stacked_cores(models, d, r, n_grid):
    """Block-diagonal stacked LHS for the single fused gather matmul.

    Coordinate k's blocks live in columns [k*N, (k+1)*N); each block's rows
    are padded to a multiple of 8 so the in-kernel row slices stay
    sublane-aligned.  The matrix is emitted twice (bf16 hi on top of bf16 lo)
    so ONE bf16 matmul recovers ~f32-accurate gathers via hi+lo.
    """
    rows = []
    block_offs = []
    off = 0
    for mdl in models:
        offs = []
        for k, blk in enumerate(_prep_model_blocks(mdl, d, r, n_grid)):
            nrow = blk.shape[0]
            nrow_pad = _round_up(nrow, 8)
            rows.append(jnp.pad(blk, ((0, nrow_pad - nrow),
                                      (k * n_grid, (d - 1 - k) * n_grid))))
            offs.append(off)
            off += nrow_pad
        block_offs.append(tuple(offs))
    stacked = jnp.concatenate(rows, axis=0)                     # (r_half, d*N) f32
    hi = stacked.astype(jnp.bfloat16)
    lo = (stacked - hi.astype(jnp.float32)).astype(jnp.bfloat16)
    return jnp.concatenate([hi, lo], axis=0), tuple(block_offs), off


def double_model_forward(pts, inner, outer, mu, grid_size, mask_model=None, tb=2048):
    """pts: (B, d) in [0, 1]. Each model is a dict {cores:(d,r,N,r), a:(r,), b:(r,)}.

    mask_model=None reproduces DoubleModel(tt_mask=None): D = vals_outer.
    (share_mask is decided by Python object identity; an equal-but-distinct
    dict evaluates a third TT chain — correct, just slower.)
    """
    B, d = pts.shape
    r = inner["cores"].shape[1]
    assert d >= 2  # TODO(synk): TT with a single core (d == 1) not supported.

    share_mask = (mask_model is None) or (mask_model is outer)
    models = [inner, outer] if share_mask else [inner, outer, mask_model]

    # 'closest' interpolation: nearest grid index per coordinate.
    idx = jnp.clip(jnp.round(pts * (grid_size - 1)), 0, grid_size - 1).astype(jnp.int32)
    idx = idx.T                                                 # (d, B), batch on lanes

    # Batch tiling (lane axis).  tb_eff is forced to a multiple of 128; when
    # the batch allows, keep >= 2 grid steps so v7x's two TensorCores both get
    # work under dimension_semantics=("parallel",) (neutral on v5e/v6e).
    b128 = _round_up(B, 128)
    tb_eff = min(_round_up(max(tb, 128), 128), b128)
    if b128 >= 256:
        tb_eff = min(tb_eff, max(128, _round_up(b128 // 2, 128)))
    B_pad = _round_up(B, tb_eff)
    if B_pad != B:
        idx = jnp.pad(idx, ((0, 0), (0, B_pad - B)))            # index 0 is always valid

    stacked, block_offs, r_half = _build_stacked_cores(models, d, r, grid_size)

    kernel = functools.partial(
        _double_tt_kernel, mu=float(mu), d=d, r=r, n_grid=grid_size,
        n_models=len(models), share_mask=share_mask,
        block_offs=block_offs, r_half=r_half)

    out = pl.pallas_call(
        kernel,
        out_shape=jax.ShapeDtypeStruct((1, B_pad), jnp.float32),
        grid=(B_pad // tb_eff,),
        in_specs=[
            pl.BlockSpec((d, tb_eff), lambda i: (0, i)),        # per-tile indices
            pl.BlockSpec(stacked.shape, lambda i: (0, 0)),      # stacked cores (resident)
        ],
        out_specs=pl.BlockSpec((1, tb_eff), lambda i: (0, i)),
        compiler_params=pltpu.CompilerParams(
            dimension_semantics=("parallel",)),
    )(idx, stacked)

    return out[0, :B]                                           # (B,)


# ----------------------------- reference (pure JAX) -----------------------------

def _tt_eval_ref(model, idx):
    d = model["cores"].shape[0]
    B = idx.shape[0]
    r = model["cores"].shape[1]
    v = jnp.broadcast_to(model["a"].reshape(1, r), (B, r))
    for k in range(d):
        slab = jnp.transpose(model["cores"][k][:, idx[:, k], :], (1, 0, 2))  # (B, r, r)
        v = jnp.einsum("bi,bij->bj", v, slab)
    return v @ model["b"]


def double_model_ref(pts, inner, outer, mask_model, mu, grid_size):
    idx = jnp.clip(jnp.round(pts * (grid_size - 1)), 0, grid_size - 1).astype(jnp.int32)
    vi = _tt_eval_ref(inner, idx)
    vo = _tt_eval_ref(outer, idx)
    D = vo if mask_model is None else _tt_eval_ref(mask_model, idx)
    mask = jnp.abs(D) < mu
    return vi * mask + vo * (~mask)


# ----------------------------- main -----------------------------

def _make_tt(key, d, r, n):
    k1, k2, k3 = jax.random.split(key, 3)
    return {
        "cores": 0.5 * jax.random.normal(k1, (d, r, n, r), dtype=jnp.float32),
        "a": jax.random.normal(k2, (r,), dtype=jnp.float32),
        "b": jax.random.normal(k3, (r,), dtype=jnp.float32),
    }


if __name__ == "__main__":
    B, d, r, N = 256, 3, 8, 16
    mu = 0.3

    key = jax.random.PRNGKey(0)
    k_pts, k_in, k_out = jax.random.split(key, 3)

    pts = jax.random.uniform(k_pts, (B, d), dtype=jnp.float32)
    inner = _make_tt(k_in, d, r, N)
    outer = _make_tt(k_out, d, r, N)

    # tt_mask=None in DoubleModel -> mask model is the outer model (D = vals_outer),
    # so the kernel evaluates only two TT chains.
    out = double_model_forward(pts, inner, outer, mu, N, mask_model=None)
    out = jax.block_until_ready(out)

    ref = double_model_ref(pts, inner, outer, None, mu, N)
    assert out.shape == (B,)
    assert jnp.allclose(out, ref, rtol=1e-4, atol=1e-4), "Pallas/JAX mismatch"

    print("KERNEL_OK")
</pallas_src>

<mosaic_0001>
module attributes {stable_mosaic.version = 11 : i64} {
  func.func @_double_tt_kernel(%arg0: i32, %arg1: memref<3x128xi32, #tpu.memory_space<vmem>>, %arg2: memref<320x48xbf16, #tpu.memory_space<vmem>>, %arg3: memref<1x128xf32, #tpu.memory_space<vmem>>) attributes {dimension_semantics = [#tpu.dimension_semantics<parallel>], iteration_bounds = array<i64: 2>, scalar_prefetch = 0 : i64, scratch_operands = 0 : i64, tpu.core_type = #tpu.core_type<tc>, window_params = [{transform_indices = @transform_0, window_bounds = array<i64: 3, 128>}, {pipeline_mode = #tpu.pipeline_mode<synchronous>, transform_indices = @transform_1, window_bounds = array<i64: 320, 48>}, {transform_indices = @transform_2, window_bounds = array<i64: 1, 128>}]} {
    %c0 = arith.constant 0 : index
    %c0_0 = arith.constant 0 : index
    %0 = vector.load %arg1[%c0, %c0_0] : memref<3x128xi32, #tpu.memory_space<vmem>>, vector<3x128xi32>
    %1 = tpu.iota {dimensions = array<i32: 0>} : vector<16x128xi32>
    %2 = vector.extract_strided_slice %0 {offsets = [0, 0], sizes = [1, 128], strides = [1, 1]} : vector<3x128xi32> to vector<1x128xi32>
    %3 = vector.broadcast %2 : vector<1x128xi32> to vector<16x128xi32>
    %4 = arith.cmpi eq, %3, %1 : vector<16x128xi32>
    %5 = arith.extui %4 : vector<16x128xi1> to vector<16x128xi32>
    %6 = arith.sitofp %5 : vector<16x128xi32> to vector<16x128xf32>
    %7 = vector.extract_strided_slice %0 {offsets = [1, 0], sizes = [1, 128], strides = [1, 1]} : vector<3x128xi32> to vector<1x128xi32>
    %8 = vector.broadcast %7 : vector<1x128xi32> to vector<16x128xi32>
    %9 = arith.cmpi eq, %8, %1 : vector<16x128xi32>
    %10 = arith.extui %9 : vector<16x128xi1> to vector<16x128xi32>
    %11 = arith.sitofp %10 : vector<16x128xi32> to vector<16x128xf32>
    %12 = vector.extract_strided_slice %0 {offsets = [2, 0], sizes = [1, 128], strides = [1, 1]} : vector<3x128xi32> to vector<1x128xi32>
    %13 = vector.broadcast %12 : vector<1x128xi32> to vector<16x128xi32>
    %14 = arith.cmpi eq, %13, %1 : vector<16x128xi32>
    %15 = arith.extui %14 : vector<16x128xi1> to vector<16x128xi32>
    %16 = arith.sitofp %15 : vector<16x128xi32> to vector<16x128xf32>
    %17 = tpu.concatenate %6, %11, %16 in 0 : vector<16x128xf32>, vector<16x128xf32>, vector<16x128xf32> -> vector<48x128xf32>
    %18 = arith.truncf %17 : vector<48x128xf32> to vector<48x128xbf16>
    %c0_1 = arith.constant 0 : index
    %c0_2 = arith.constant 0 : index
    %19 = vector.load %arg2[%c0_1, %c0_2] : memref<320x48xbf16, #tpu.memory_space<vmem>>, vector<320x48xbf16>
    %cst = arith.constant dense<0.000000e+00> : vector<320x128xf32>
    %20 = tpu.matmul %19, %18, %cst {dimension_numbers = #tpu.dot_dimension_numbers<[1], [0], [0], [1], [0, 0, 1, 1], [], []>} : vector<320x48xbf16>, vector<48x128xbf16>, vector<320x128xf32> -> vector<320x128xf32>
    %21 = vector.extract_strided_slice %20 {offsets = [0, 0], sizes = [160, 128], strides = [1, 1]} : vector<320x128xf32> to vector<160x128xf32>
    %22 = vector.extract_strided_slice %20 {offsets = [160, 0], sizes = [160, 128], strides = [1, 1]} : vector<320x128xf32> to vector<160x128xf32>
    %23 = arith.addf %21, %22 : vector<160x128xf32>
    %24 = vector.extract_strided_slice %23 {offsets = [0, 0], sizes = [8, 128], strides = [1, 1]} : vector<160x128xf32> to vector<8x128xf32>
    %25 = vector.extract_strided_slice %23 {offsets = [8, 0], sizes = [64, 128], strides = [1, 1]} : vector<160x128xf32> to vector<64x128xf32>
    %26 = vector.shape_cast %25 : vector<64x128xf32> to vector<8x8x128xf32>
    %27 = vector.shape_cast %24 : vector<8x128xf32> to vector<1x8x128xf32>
    %28 = vector.broadcast %27 : vector<1x8x128xf32> to vector<8x8x128xf32>
    %29 = arith.mulf %26, %28 : vector<8x8x128xf32>
    %cst_3 = arith.constant dense<0.000000e+00> : vector<8x128xf32>
    %30 = vector.multi_reduction <add>, %29, %cst_3 [1] : vector<8x8x128xf32> to vector<8x128xf32>
    %31 = vector.extract_strided_slice %23 {offsets = [72, 0], sizes = [8, 128], strides = [1, 1]} : vector<160x128xf32> to vector<8x128xf32>
    %32 = arith.mulf %30, %31 : vector<8x128xf32>
    %cst_4 = arith.constant dense<0.000000e+00> : vector<128xf32>
    %33 = vector.multi_reduction <add>, %32, %cst_4 [0] : vector<8x128xf32> to vector<128xf32>
    %34 = vector.shape_cast %33 : vector<128xf32> to vector<1x128xf32>
    %35 = vector.extract_strided_slice %23 {offsets = [80, 0], sizes = [8, 128], strides = [1, 1]} : vector<160x128xf32> to vector<8x128xf32>
    %36 = vector.extract_strided_slice %23 {offsets = [88, 0], sizes = [64, 128], strides = [1, 1]} : vector<160x128xf32> to vector<64x128xf32>
    %37 = vector.shape_cast %36 : vector<64x128xf32> to vector<8x8x128xf32>
    %38 = vector.shape_cast %35 : vector<8x128xf32> to vector<1x8x128xf32>
    %39 = vector.broadcast %38 : vector<1x8x128xf32> to vector<8x8x128xf32>
    %40 = arith.mulf %37, %39 : vector<8x8x128xf32>
    %cst_5 = arith.constant dense<0.000000e+00> : vector<8x128xf32>
    %41 = vector.multi_reduction <add>, %40, %cst_5 [1] : vector<8x8x128xf32> to vector<8x128xf32>
    %42 = vector.extract_strided_slice %23 {offsets = [152, 0], sizes = [8, 128], strides = [1, 1]} : vector<160x128xf32> to vector<8x128xf32>
    %43 = arith.mulf %41, %42 : vector<8x128xf32>
    %cst_6 = arith.constant dense<0.000000e+00> : vector<128xf32>
    %44 = vector.multi_reduction <add>, %43, %cst_6 [0] : vector<8x128xf32> to vector<128xf32>
    %45 = vector.shape_cast %44 : vector<128xf32> to vector<1x128xf32>
    %46 = math.absf %45 : vector<1x128xf32>
    %cst_7 = arith.constant 3.000000e-01 : f32
    %47 = vector.broadcast %cst_7 : f32 to vector<1x128xf32>
    %48 = arith.cmpf olt, %46, %47 : vector<1x128xf32>
    %49 = arith.extui %48 : vector<1x128xi1> to vector<1x128xi32>
    %50 = arith.sitofp %49 : vector<1x128xi32> to vector<1x128xf32>
    %51 = arith.mulf %34, %50 : vector<1x128xf32>
    %cst_8 = arith.constant 1.000000e+00 : f32
    %52 = vector.broadcast %cst_8 : f32 to vector<1x128xf32>
    %53 = arith.subf %52, %50 : vector<1x128xf32>
    %54 = arith.mulf %45, %53 : vector<1x128xf32>
    %55 = arith.addf %51, %54 : vector<1x128xf32>
    %c0_9 = arith.constant 0 : index
    %c0_10 = arith.constant 0 : index
    %56 = vector.load %arg3[%c0_9, %c0_10] : memref<1x128xf32, #tpu.memory_space<vmem>>, vector<1x128xf32>
    tpu.vector_store %arg3[%c0_9, %c0_10], %55 {strides = array<i32>} : memref<1x128xf32, #tpu.memory_space<vmem>>, vector<1x128xf32>,
    return
  }
  func.func @transform_0(%arg0: i32) -> (i32, i32) {
    %c0_i32 = arith.constant 0 : i32
    %c0_i32_0 = arith.constant 0 : i32
    return %c0_i32, %arg0 : i32, i32
  }
  func.func @transform_1(%arg0: i32) -> (i32, i32) {
    %c0_i32 = arith.constant 0 : i32
    %c0_i32_0 = arith.constant 0 : i32
    %c0_i32_1 = arith.constant 0 : i32
    return %c0_i32, %c0_i32_0 : i32, i32
  }
  func.func @transform_2(%arg0: i32) -> (i32, i32) {
    %c0_i32 = arith.constant 0 : i32
    %c0_i32_0 = arith.constant 0 : i32
    return %c0_i32, %arg0 : i32, i32
  }
}

</mosaic_0001>

<llo_original>
// kernel: tpu_custom_call.1
$region0: #{tpu_custom_call.1}
  #allocation0 [shape = 'u32[]', space=smem, size = 0x4, offset = 0x4, fixed_abs, tag = 'smem constant byte address 0x4 - core index']
  #allocation1 [shape = 'u32[144,128]{1,0:T(1,128)}', space=vmem, size = 0x12000, scoped, tag = 'internal scratch']
  %s0 = inlined_call_operand.vmem [shape: s32[3,256], index: 0, kind: input, shape index: {}]
  %s1 = inlined_call_operand.vmem [shape: bf16[320,48], index: 1, kind: input, shape index: {}]
  %s2 = inlined_call_operand.hbm [shape: f32[1,256], index: 2, kind: output, shape index: {}]
  %s3 = sld [smem:[#allocation0]]
  $region41: #{tpu_custom_call.1} parent=0
    _
  %s5 = ssub.s32 1, %s3
  %s6 = scalar_select 0, %s5, %s3
  $region1: #{tpu_custom_call.1} parent=0
    #allocation2 [shape = 'u8[1024]{0}', space=vmem, size = 0x400, scoped, tag = 'output window, operand 0']
    #allocation3 [shape = 's32[2]{0}', space=sflag, size = 0x8, scoped, tag = 'scoped memory for tpu_custom_call.1']
    %7 = vsyncpa [#allocation3], 0
    %s8 = scalar_lea.sflag [#allocation3], 1
    %9 = vsyncpa %s8, 0
    loop: start=0, step=1, limit=4
    $region2: #{tpu_custom_call.1} parent=1 // loop_pre_header
      _
    $region3: #{tpu_custom_call.1} parent=1 // loop_header
      %s11 = sphi 0, %s15
      %p12 = scmp.ge.s32.totalorder %s11, 4
      %s21 = sphi 0, %s23
      %s24 = sphi 0, %s21
      %s25 = sphi 0, %s24
      %s41 = sphi 0, %s25
      %s45 = sphi 0, %s45
      %s47 = sphi 0, %s45
      %s48 = sphi 0, %s47
      %s62 = sphi 0, %s48
      %s68 = sphi 0, %s70
      %s71 = sphi 0, %s68
      %s72 = sphi 0, %s71
      %s88 = sphi 0, %s72
    $region4: #{tpu_custom_call.1} parent=1 // loop_header_branch
      %14 = sbr.rel (%p12) target = $region8
    $region5: #{tpu_custom_call.1} parent=1 // loop_body
      %s16 = ssub.s32 %s11, 1
      %s17 = ssub.s32 %s11, 2
      %s18 = sadd.s32 %s11, 1
      %s19 = ssub.s32 %s11, %s18
      %p20 = scmp.eq.s32.totalorder %s19, 0
      %s22 = sadd.s32 %s21, 1
      %s23 = scalar_select %p20, %s21, %s22
      %p26 = pneg %p20
      %p27 = scmp.eq.s32.totalorder %s11, 1
      %p28 = por %p26, %p27
      %p29 = scmp.ne.s32.totalorder %s21, %s24
      %p30 = scmp.eq.s32.totalorder %s11, 0
      %p31 = por %p29, %p30
      %p32 = scmp.ne.s32.totalorder %s21, %s24
      %p33 = scmp.eq.s32.totalorder %s16, 1
      %p34 = por %p32, %p33
      %p35 = scmp.ne.s32.totalorder %s24, %s25
      %p36 = scmp.eq.s32.totalorder %s16, 0
      %p37 = por %p35, %p36
      %p38 = scmp.ne.s32.totalorder %s24, %s25
      %p39 = scmp.eq.s32.totalorder %s17, 1
      %p40 = por %p38, %p39
      %p42 = scmp.ne.s32.totalorder %s25, %s41
      %p43 = scmp.eq.s32.totalorder %s17, 0
      %p44 = por %p42, %p43
      %s46 = sadd.s32 %s45, 1
      %p49 = scmp.eq.s32.totalorder %s11, 1
      %p50 = scmp.ne.s32.totalorder %s45, %s47
      %p51 = scmp.eq.s32.totalorder %s11, 0
      %p52 = por %p50, %p51
      %p53 = scmp.ne.s32.totalorder %s45, %s47
      %p54 = scmp.eq.s32.totalorder %s16, 1
      %p55 = por %p53, %p54
      %p56 = scmp.ne.s32.totalorder %s47, %s48
      %p57 = scmp.eq.s32.totalorder %s16, 0
      %p58 = por %p56, %p57
      %p59 = scmp.ne.s32.totalorder %s47, %s48
      %p60 = scmp.eq.s32.totalorder %s17, 1
      %p61 = por %p59, %p60
      %p63 = scmp.ne.s32.totalorder %s48, %s62
      %p64 = scmp.eq.s32.totalorder %s17, 0
      %p65 = por %p63, %p64
      %s66 = ssub.s32 %s11, %s18
      %p67 = scmp.eq.s32.totalorder %s66, 0
      %s69 = sadd.s32 %s68, 1
      %s70 = scalar_select %p67, %s68, %s69
      %p73 = pneg %p67
      %p74 = scmp.eq.s32.totalorder %s11, 1
      %p75 = por %p73, %p74
      %p76 = scmp.ne.s32.totalorder %s68, %s71
      %p77 = scmp.eq.s32.totalorder %s11, 0
      %p78 = por %p76, %p77
      %p79 = scmp.ne.s32.totalorder %s68, %s71
      %p80 = scmp.eq.s32.totalorder %s16, 1
      %p81 = por %p79, %p80
      %p82 = scmp.ne.s32.totalorder %s71, %s72
      %p83 = scmp.eq.s32.totalorder %s16, 0
      %p84 = por %p82, %p83
      %p85 = scmp.ne.s32.totalorder %s71, %s72
      %p86 = scmp.eq.s32.totalorder %s17, 1
      %p87 = por %p85, %p86
      %p89 = scmp.ne.s32.totalorder %s72, %s88
      %p90 = scmp.eq.s32.totalorder %s17, 0
      %p91 = por %p89, %p90
      %p92 = scmp.le.s32.totalorder 1, %s11
      %p93 = scmp.lt.s32.totalorder %s11, 3
      %p94 = pnand %p92, %p93
      %p95 = pneg %p94
      // Predicated region
      $region9: #{tpu_custom_call.1} parent=5 // pred_check
        _
      $region10: #{tpu_custom_call.1} parent=5 // pred_check_branch
        %97 = sbr.rel (%p94) target = $region12
      $region11: #{tpu_custom_call.1} parent=5 // pred_region
        %s98 = ssub.s32 %s11, 1
        // Predicated region
        $region13: #{tpu_custom_call.1} parent=11 // pred_check
          %p99 = pneg %p58
        $region14: #{tpu_custom_call.1} parent=11 // pred_check_branch
          %101 = sbr.rel (%p99) target = $region16
        $region15: #{tpu_custom_call.1} parent=11 // pred_region
          _
        $region16: #{tpu_custom_call.1} parent=11 // pred_fallthru
          _
      $region12: #{tpu_custom_call.1} parent=5 // pred_fallthru
        _
      %p102 = scmp.lt.s32.totalorder %s11, 2
      // Predicated region
      $region17: #{tpu_custom_call.1} parent=5 // pred_check
        %p103 = pneg %p102
      $region18: #{tpu_custom_call.1} parent=5 // pred_check_branch
        %105 = sbr.rel (%p103) target = $region20
      $region19: #{tpu_custom_call.1} parent=5 // pred_region
        // Predicated region
        $region21: #{tpu_custom_call.1} parent=19 // pred_check
          %p106 = pneg %p31
        $region22: #{tpu_custom_call.1} parent=19 // pred_check_branch
          %108 = sbr.rel (%p106) target = $region24
        $region23: #{tpu_custom_call.1} parent=19 // pred_region
          %p109 = scmp.lt.s32.totalorder %s11, 1
          %s110 = scalar_select %p109, %s11, 1
          %s111 = smul.addr %s110, 4
          %s112 = scalar_lea.vmem %s0, %s111
        $region24: #{tpu_custom_call.1} parent=19 // pred_fallthru
          _
      $region20: #{tpu_custom_call.1} parent=5 // pred_fallthru
        _
      %p113 = scmp.le.s32.totalorder 1, %s11
      %p114 = scmp.lt.s32.totalorder %s11, 3
      %p115 = pnand %p113, %p114
      %p116 = pneg %p115
      // Predicated region
      $region25: #{tpu_custom_call.1} parent=5 // pred_check
        _
      $region26: #{tpu_custom_call.1} parent=5 // pred_check_branch
        %118 = sbr.rel (%p115) target = $region28
      $region27: #{tpu_custom_call.1} parent=5 // pred_region
        %s119 = ssub.s32 %s11, 1
        %p120 = scmp.lt.s32.totalorder %s16, 1
        %s121 = scalar_select %p120, %s16, 1
        %s122 = smul.addr %s121, 4
        %s123 = scalar_lea.vmem %s0, %s122
        %p124 = pneg %p37
        %p125 = pneg %p34
        %p126 = pneg %p58
        %p127 = pneg %p55
        %p128 = pneg %p84
        %p129 = pneg %p81
        %s130 = sand.u32 %s71, 1
        %s131 = scalar_lea.sflag [#allocation3], %s130
        %s132 = sand.u32 %s71, 1
        %s133 = scalar_lea.vmem [#allocation2], %s132
        %p134 = scmp.lt.s32.totalorder %s16, 1
        %s135 = scalar_select %p134, %s16, 1
        %s136 = smul.addr %s135, 4
        %s137 = scalar_lea.vmem %s0, %s136
        %v139 = vld [vmem:[%s137] sm:$0x7]
        %v140 = vlaneseq
        %v141 = vshrl.u32 %v140, 7
        %v142 = vadd.s32 %v141, 8
        %v143 = vlaneseq
        %v144 = vshrl.u32 %v143, 7
        %v145 = vsub.s32 0, %v144
        %v146 = vrot.slane %v139, %v145
        %vm147 = vcmp.eq.s32.totalorder %v146, %v141
        %vm148 = vcmp.eq.s32.totalorder %v146, %v142
        %v149 = vsel %vm147, 1, 0
        %v150 = vsel %vm148, 1, 0
        %v151 = vcvt.s32.f32 %v149
        %v152 = vcvt.s32.f32 %v150
        %v153 = vlaneseq
        %v154 = vshrl.u32 %v153, 7
        %v155 = vsub.s32 1, %v154
        %v156 = vrot.slane %v139, %v155
        %vm157 = vcmp.eq.s32.totalorder %v156, %v141
        %vm158 = vcmp.eq.s32.totalorder %v156, %v142
        %v159 = vsel %vm157, 1, 0
        %v160 = vsel %vm158, 1, 0
        %v161 = vcvt.s32.f32 %v159
        %v162 = vcvt.s32.f32 %v160
        %v163 = vlaneseq
        %v164 = vshrl.u32 %v163, 7
        %v165 = vsub.s32 2, %v164
        %v166 = vrot.slane %v139, %v165
        %vm167 = vcmp.eq.s32.totalorder %v166, %v141
        %vm168 = vcmp.eq.s32.totalorder %v166, %v142
        %v169 = vsel %vm167, 1, 0
        %v170 = vsel %vm168, 1, 0
        %v171 = vcvt.s32.f32 %v169
        %v172 = vcvt.s32.f32 %v170
        %v173 = vpack.c.bf16 %v152, %v151
        %v174 = vpack.c.bf16 %v162, %v161
        %v175 = vpack.c.bf16 %v172, %v171
        %v176 = vld [vmem:[%s1] sm:$0xf]
        %v177 = vld [vmem:[%s1 + $0x4] sm:$0xf]
        %v178 = vld [vmem:[%s1 + $0x8] sm:$0xf]
        %v179 = vld [vmem:[%s1 + $0xc] sm:$0xf]
        %v180 = vld [vmem:[%s1 + $0x10] sm:$0xf]
        %v181 = vld [vmem:[%s1 + $0x14] sm:$0xf]
        %v182 = vld [vmem:[%s1 + $0x18] sm:$0xf]
        %v183 = vld [vmem:[%s1 + $0x1c] sm:$0xf]
        %v184 = vld [vmem:[%s1 + $0x20] sm:$0xf]
        %v185 = vld [vmem:[%s1 + $0x24] sm:$0xf]
        %v186 = vld [vmem:[%s1 + $0x28] sm:$0xf]
        %v187 = vld [vmem:[%s1 + $0x2c] sm:$0xf]
        %v188 = vld [vmem:[%s1 + $0x30] sm:$0xf]
        %v189 = vld [vmem:[%s1 + $0x34] sm:$0xf]
        %v190 = vld [vmem:[%s1 + $0x38] sm:$0xf]
        %v191 = vld [vmem:[%s1 + $0x3c] sm:$0xf]
        %v192 = vld [vmem:[%s1 + $0x40] sm:$0xf]
        %v193 = vld [vmem:[%s1 + $0x44] sm:$0xf]
        %v194 = vld [vmem:[%s1 + $0x48] sm:$0xf]
        %v195 = vld [vmem:[%s1 + $0x4c] sm:$0xf]
        %v196 = vld [vmem:[%s1 + $0x50] sm:$0xf]
        %v197 = vld [vmem:[%s1 + $0x54] sm:$0xf]
        %v198 = vld [vmem:[%s1 + $0x58] sm:$0xf]
        %v199 = vld [vmem:[%s1 + $0x5c] sm:$0xf]
        %v200 = vld [vmem:[%s1 + $0x60] sm:$0xf]
        %v201 = vld [vmem:[%s1 + $0x64] sm:$0xf]
        %v202 = vld [vmem:[%s1 + $0x68] sm:$0xf]
        %v203 = vld [vmem:[%s1 + $0x6c] sm:$0xf]
        %v204 = vld [vmem:[%s1 + $0x70] sm:$0xf]
        %v205 = vld [vmem:[%s1 + $0x74] sm:$0xf]
        %v206 = vld [vmem:[%s1 + $0x78] sm:$0xf]
        %v207 = vld [vmem:[%s1 + $0x7c] sm:$0xf]
        %v208 = vld [vmem:[%s1 + $0x80] sm:$0xf]
        %v209 = vld [vmem:[%s1 + $0x84] sm:$0xf]
        %v210 = vld [vmem:[%s1 + $0x88] sm:$0xf]
        %v211 = vld [vmem:[%s1 + $0x8c] sm:$0xf]
        %v212 = vld [vmem:[%s1 + $0x90] sm:$0xf]
        %v213 = vld [vmem:[%s1 + $0x94] sm:$0xf]
        %v214 = vld [vmem:[%s1 + $0x98] sm:$0xf]
        %v215 = vld [vmem:[%s1 + $0x9c] sm:$0xf]
        %v256 = vunpack.c.l.b16 %v176
        %v257 = vunpack.c.l.b16 %v177
        %v258 = vunpack.c.l.b16 %v178
        %v259 = vunpack.c.l.b16 %v179
        %v260 = vunpack.c.l.b16 %v180
        %v261 = vunpack.c.l.b16 %v181
        %v262 = vunpack.c.l.b16 %v182
        %v263 = vunpack.c.l.b16 %v183
        %v264 = vunpack.c.l.b16 %v184
        %v265 = vunpack.c.l.b16 %v185
        %v266 = vunpack.c.l.b16 %v186
        %v267 = vunpack.c.l.b16 %v187
        %v268 = vunpack.c.l.b16 %v188
        %v269 = vunpack.c.l.b16 %v189
        %v270 = vunpack.c.l.b16 %v190
        %v271 = vunpack.c.l.b16 %v191
        %v272 = vunpack.c.l.b16 %v192
        %v273 = vunpack.c.l.b16 %v193
        %v274 = vunpack.c.l.b16 %v194
        %v275 = vunpack.c.l.b16 %v195
        %v276 = vunpack.c.l.b16 %v196
        %v277 = vunpack.c.l.b16 %v197
        %v278 = vunpack.c.l.b16 %v198
        %v279 = vunpack.c.l.b16 %v199
        %v280 = vunpack.c.l.b16 %v200
        %v281 = vunpack.c.l.b16 %v201
        %v282 = vunpack.c.l.b16 %v202
        %v283 = vunpack.c.l.b16 %v203
        %v284 = vunpack.c.l.b16 %v204
        %v285 = vunpack.c.l.b16 %v205
        %v286 = vunpack.c.l.b16 %v206
        %v287 = vunpack.c.l.b16 %v207
        %v288 = vunpack.c.l.b16 %v208
        %v289 = vunpack.c.l.b16 %v209
        %v290 = vunpack.c.l.b16 %v210
        %v291 = vunpack.c.l.b16 %v211
        %v292 = vunpack.c.l.b16 %v212
        %v293 = vunpack.c.l.b16 %v213
        %v294 = vunpack.c.l.b16 %v214
        %v295 = vunpack.c.l.b16 %v215
        %v296 = vpack.c.b16 %v257, %v256
        %v297 = vpack.c.b16 %v259, %v258
        %v298 = vpack.c.b16 %v261, %v260
        %v299 = vpack.c.b16 %v263, %v262
        %v300 = vpack.c.b16 %v265, %v264
        %v301 = vpack.c.b16 %v267, %v266
        %v302 = vpack.c.b16 %v269, %v268
        %v303 = vpack.c.b16 %v271, %v270
        %v304 = vpack.c.b16 %v273, %v272
        %v305 = vpack.c.b16 %v275, %v274
        %v306 = vpack.c.b16 %v277, %v276
        %v307 = vpack.c.b16 %v279, %v278
        %v308 = vpack.c.b16 %v281, %v280
        %v309 = vpack.c.b16 %v283, %v282
        %v310 = vpack.c.b16 %v285, %v284
        %v311 = vpack.c.b16 %v287, %v286
        %v312 = vpack.c.b16 %v289, %v288
        %v313 = vpack.c.b16 %v291, %v290
        %v314 = vpack.c.b16 %v293, %v292
        %v315 = vpack.c.b16 %v295, %v294
        %vm316 = vcmask 392192
        %v318 = vsel %vm316, %v296, 0
        %v321 = vsel %vm316, %v297, 0
        %v324 = vsel %vm316, %v298, 0
        %v327 = vsel %vm316, %v299, 0
        %v330 = vsel %vm316, %v300, 0
        %v333 = vsel %vm316, %v301, 0
        %v336 = vsel %vm316, %v302, 0
        %v339 = vsel %vm316, %v303, 0
        %v342 = vsel %vm316, %v304, 0
        %v345 = vsel %vm316, %v305, 0
        %v348 = vsel %vm316, %v306, 0
        %v351 = vsel %vm316, %v307, 0
        %v354 = vsel %vm316, %v308, 0
        %v357 = vsel %vm316, %v309, 0
        %v360 = vsel %vm316, %v310, 0
        %v363 = vsel %vm316, %v311, 0
        %v366 = vsel %vm316, %v312, 0
        %v369 = vsel %vm316, %v313, 0
        %v372 = vsel %vm316, %v314, 0
        %v375 = vsel %vm316, %v315, 0
        %377 = vmatprep.subr.bf16.mxu0 0
        %378 = vmatpush1.bf16.msra.mxu0 0
        %379 = vmatprep.subr.bf16.mxu0 0
        %380 = vmatpush1.bf16.msra.mxu0 0
        %381 = vmatprep.subr.bf16.mxu0 0
        %382 = vmatpush1.bf16.msra.mxu0 0
        %383 = vmatprep.subr.bf16.mxu0 0
        %384 = vmatpush1.bf16.msra.mxu0 0
        %385 = vmatprep.subr.bf16.mxu0 0
        %386 = vmatpush1.bf16.msra.mxu0 0
        %387 = vmatprep.subr.bf16.mxu0 0
        %388 = vmatpush1.bf16.msra.mxu0 %v175
        %389 = vmatprep.subr.bf16.mxu0 0
        %390 = vmatpush1.bf16.msra.mxu0 %v174
        %391 = vmatprep.subr.bf16.mxu0 0
        %392 = vmatpush1.bf16.msra.mxu0 %v173
        %393 = vmatprep.subr.bf16.mxu0 0
        %394 = vmatpush2.bf16.msra.mxu0 0
        %395 = vmatprep.subr.bf16.mxu0 0
        %396 = vmatpush2.bf16.msra.mxu0 0
        %397 = vmatprep.subr.bf16.mxu0 0
        %398 = vmatpush2.bf16.msra.mxu0 0
        %399 = vmatprep.subr.bf16.mxu0 0
        %400 = vmatpush2.bf16.msra.mxu0 0
        %401 = vmatprep.subr.bf16.mxu0 0
        %402 = vmatpush2.bf16.msra.mxu0 0
        %403 = vmatprep.subr.bf16.mxu0 0
        %404 = vmatpush2.bf16.msra.mxu0 0
        %405 = vmatprep.subr.bf16.mxu0 0
        %406 = vmatpush2.bf16.msra.mxu0 0
        %407 = vmatprep.subr.bf16.mxu0 0
        %408 = vmatpush2.bf16.msra.mxu0 0
        %409 = vmatprep.mubr.bf16.mxu0 0
        %410 = vmatmul.mubr.bf16.gmra.mxu0 %v318
        %v411 = vpop.f32.mrf.mxu0
        %v412 = vadd.f32 0.0, %v411
        %v413 = vpop.f32.mrf.mxu0
        %v414 = vpop.f32.mrf.mxu0
        %v415 = vadd.f32 0.0, %v414
        %v416 = vpop.f32.mrf.mxu0
        %417 = vmatprep.mubr.bf16.mxu0 0
        %418 = vmatmul.mubr.bf16.gmra.mxu0 %v321
        %v419 = vpop.f32.mrf.mxu0
        %v420 = vadd.f32 0.0, %v419
        %v421 = vpop.f32.mrf.mxu0
        %v422 = vpop.f32.mrf.mxu0
        %v423 = vadd.f32 0.0, %v422
        %v424 = vpop.f32.mrf.mxu0
        %425 = vmatprep.mubr.bf16.mxu0 0
        %426 = vmatmul.mubr.bf16.gmra.mxu0 %v324
        %v427 = vpop.f32.mrf.mxu0
        %v428 = vadd.f32 0.0, %v427
        %v429 = vpop.f32.mrf.mxu0
        %v430 = vpop.f32.mrf.mxu0
        %v431 = vadd.f32 0.0, %v430
        %v432 = vpop.f32.mrf.mxu0
        %433 = vmatprep.mubr.bf16.mxu0 0
        %434 = vmatmul.mubr.bf16.gmra.mxu0 %v327
        %v435 = vpop.f32.mrf.mxu0
        %v436 = vadd.f32 0.0, %v435
        %v437 = vpop.f32.mrf.mxu0
        %v438 = vpop.f32.mrf.mxu0
        %v439 = vadd.f32 0.0, %v438
        %v440 = vpop.f32.mrf.mxu0
        %441 = vmatprep.mubr.bf16.mxu0 0
        %442 = vmatmul.mubr.bf16.gmra.mxu0 %v330
        %v443 = vpop.f32.mrf.mxu0
        %v444 = vadd.f32 0.0, %v443
        %v445 = vpop.f32.mrf.mxu0
        %v446 = vpop.f32.mrf.mxu0
        %v447 = vadd.f32 0.0, %v446
        %v448 = vpop.f32.mrf.mxu0
        %449 = vmatprep.mubr.bf16.mxu0 0
        %450 = vmatmul.mubr.bf16.gmra.mxu0 %v333
        %v451 = vpop.f32.mrf.mxu0
        %v452 = vadd.f32 0.0, %v451
        %v453 = vpop.f32.mrf.mxu0
        %v454 = vpop.f32.mrf.mxu0
        %v455 = vadd.f32 0.0, %v454
        %v456 = vpop.f32.mrf.mxu0
        %457 = vmatprep.mubr.bf16.mxu0 0
        %458 = vmatmul.mubr.bf16.gmra.mxu0 %v336
        %v459 = vpop.f32.mrf.mxu0
        %v460 = vadd.f32 0.0, %v459
        %v461 = vpop.f32.mrf.mxu0
        %v462 = vpop.f32.mrf.mxu0
        %v463 = vadd.f32 0.0, %v462
        %v464 = vpop.f32.mrf.mxu0
        %465 = vmatprep.mubr.bf16.mxu0 0
        %466 = vmatmul.mubr.bf16.gmra.mxu0 %v339
        %v467 = vpop.f32.mrf.mxu0
        %v468 = vadd.f32 0.0, %v467
        %v469 = vpop.f32.mrf.mxu0
        %v470 = vpop.f32.mrf.mxu0
        %v471 = vadd.f32 0.0, %v470
        %v472 = vpop.f32.mrf.mxu0
        %473 = vmatprep.mubr.bf16.mxu0 0
        %474 = vmatmul.mubr.bf16.gmra.mxu0 %v342
        %v475 = vpop.f32.mrf.mxu0
        %v476 = vadd.f32 0.0, %v475
        %v477 = vpop.f32.mrf.mxu0
        %v478 = vpop.f32.mrf.mxu0
        %v479 = vadd.f32 0.0, %v478
        %v480 = vpop.f32.mrf.mxu0
        %481 = vmatprep.mubr.bf16.mxu0 0
        %482 = vmatmul.mubr.bf16.gmra.mxu0 %v345
        %v483 = vpop.f32.mrf.mxu0
        %v484 = vadd.f32 0.0, %v483
        %v485 = vpop.f32.mrf.mxu0
        %v486 = vpop.f32.mrf.mxu0
        %v487 = vadd.f32 0.0, %v486
        %v488 = vpop.f32.mrf.mxu0
        %489 = vmatprep.mubr.bf16.mxu0 0
        %490 = vmatmul.mubr.bf16.gmra.mxu0 %v348
        %v491 = vpop.f32.mrf.mxu0
        %v492 = vadd.f32 0.0, %v491
        %v493 = vpop.f32.mrf.mxu0
        %v494 = vpop.f32.mrf.mxu0
        %v495 = vadd.f32 0.0, %v494
        %v496 = vpop.f32.mrf.mxu0
        %497 = vmatprep.mubr.bf16.mxu0 0
        %498 = vmatmul.mubr.bf16.gmra.mxu0 %v351
        %v499 = vpop.f32.mrf.mxu0
        %v500 = vadd.f32 0.0, %v499
        %v501 = vpop.f32.mrf.mxu0
        %v502 = vpop.f32.mrf.mxu0
        %v503 = vadd.f32 0.0, %v502
        %v504 = vpop.f32.mrf.mxu0
        %505 = vmatprep.mubr.bf16.mxu0 0
        %506 = vmatmul.mubr.bf16.gmra.mxu0 %v354
        %v507 = vpop.f32.mrf.mxu0
        %v508 = vadd.f32 0.0, %v507
        %v509 = vpop.f32.mrf.mxu0
        %v510 = vpop.f32.mrf.mxu0
        %v511 = vadd.f32 0.0, %v510
        %v512 = vpop.f32.mrf.mxu0
        %513 = vmatprep.mubr.bf16.mxu0 0
        %514 = vmatmul.mubr.bf16.gmra.mxu0 %v357
        %v515 = vpop.f32.mrf.mxu0
        %v516 = vadd.f32 0.0, %v515
        %v517 = vpop.f32.mrf.mxu0
        %v518 = vpop.f32.mrf.mxu0
        %v519 = vadd.f32 0.0, %v518
        %v520 = vpop.f32.mrf.mxu0
        %521 = vmatprep.mubr.bf16.mxu0 0
        %522 = vmatmul.mubr.bf16.gmra.mxu0 %v360
        %v523 = vpop.f32.mrf.mxu0
        %v524 = vadd.f32 0.0, %v523
        %v525 = vpop.f32.mrf.mxu0
        %v526 = vpop.f32.mrf.mxu0
        %v527 = vadd.f32 0.0, %v526
        %v528 = vpop.f32.mrf.mxu0
        %529 = vmatprep.mubr.bf16.mxu0 0
        %530 = vmatmul.mubr.bf16.gmra.mxu0 %v363
        %v531 = vpop.f32.mrf.mxu0
        %v532 = vadd.f32 0.0, %v531
        %v533 = vpop.f32.mrf.mxu0
        %v534 = vpop.f32.mrf.mxu0
        %v535 = vadd.f32 0.0, %v534
        %v536 = vpop.f32.mrf.mxu0
        %537 = vmatprep.mubr.bf16.mxu0 0
        %538 = vmatmul.mubr.bf16.gmra.mxu0 %v366
        %v539 = vpop.f32.mrf.mxu0
        %v540 = vadd.f32 0.0, %v539
        %v541 = vpop.f32.mrf.mxu0
        %v542 = vpop.f32.mrf.mxu0
        %v543 = vadd.f32 0.0, %v542
        %v544 = vpop.f32.mrf.mxu0
        %545 = vmatprep.mubr.bf16.mxu0 0
        %546 = vmatmul.mubr.bf16.gmra.mxu0 %v369
        %v547 = vpop.f32.mrf.mxu0
        %v548 = vadd.f32 0.0, %v547
        %v549 = vpop.f32.mrf.mxu0
        %v550 = vpop.f32.mrf.mxu0
        %v551 = vadd.f32 0.0, %v550
        %v552 = vpop.f32.mrf.mxu0
        %553 = vmatprep.mubr.bf16.mxu0 0
        %554 = vmatmul.mubr.bf16.gmra.mxu0 %v372
        %v555 = vpop.f32.mrf.mxu0
        %v556 = vadd.f32 0.0, %v555
        %v557 = vpop.f32.mrf.mxu0
        %v558 = vpop.f32.mrf.mxu0
        %v559 = vadd.f32 0.0, %v558
        %v560 = vpop.f32.mrf.mxu0
        %561 = vmatprep.mubr.bf16.mxu0 0
        %562 = vmatmul.mubr.bf16.gmra.mxu0 %v375
        %v563 = vpop.f32.mrf.mxu0
        %v564 = vadd.f32 0.0, %v563
        %v565 = vpop.f32.mrf.mxu0
        %v566 = vpop.f32.mrf.mxu0
        %v567 = vadd.f32 0.0, %v566
        %v568 = vpop.f32.mrf.mxu0
        %569 = vdwg.mxu0
        %v570 = vadd.f32 %v412, %v492
        %v571 = vadd.f32 %v415, %v495
        %v572 = vadd.f32 %v420, %v500
        %v573 = vadd.f32 %v423, %v503
        %v574 = vadd.f32 %v428, %v508
        %v575 = vadd.f32 %v431, %v511
        %v576 = vadd.f32 %v436, %v516
        %v577 = vadd.f32 %v439, %v519
        %v578 = vadd.f32 %v444, %v524
        %v579 = vadd.f32 %v447, %v527
        %v580 = vadd.f32 %v452, %v532
        %v581 = vadd.f32 %v455, %v535
        %v582 = vadd.f32 %v460, %v540
        %v583 = vadd.f32 %v463, %v543
        %v584 = vadd.f32 %v468, %v548
        %v585 = vadd.f32 %v471, %v551
        %v586 = vadd.f32 %v476, %v556
        %v587 = vadd.f32 %v479, %v559
        %v588 = vadd.f32 %v484, %v564
        %v589 = vadd.f32 %v487, %v567
        %v590 = vmul.f32 %v571, %v570
        %v591 = vmul.f32 %v572, %v570
        %v592 = vmul.f32 %v573, %v570
        %v593 = vmul.f32 %v574, %v570
        %v594 = vmul.f32 %v575, %v570
        %v595 = vmul.f32 %v576, %v570
        %v596 = vmul.f32 %v577, %v570
        %v597 = vmul.f32 %v578, %v570
        %v598 = vrot.slane %v590, 4
        %v599 = vadd.f32 %v590, %v598
        %v600 = vrot.slane %v599, 2
        %v601 = vadd.f32 %v599, %v600
        %v602 = vrot.slane %v601, 1
        %v603 = vadd.f32 %v601, %v602
        %v604 = vrot.slane %v591, 4
        %v605 = vadd.f32 %v591, %v604
        %v606 = vrot.slane %v605, 2
        %v607 = vadd.f32 %v605, %v606
        %v608 = vrot.slane %v607, 1
        %v609 = vadd.f32 %v607, %v608
        %v610 = vrot.slane %v592, 4
        %v611 = vadd.f32 %v592, %v610
        %v612 = vrot.slane %v611, 2
        %v613 = vadd.f32 %v611, %v612
        %v614 = vrot.slane %v613, 1
        %v615 = vadd.f32 %v613, %v614
        %v616 = vrot.slane %v593, 4
        %v617 = vadd.f32 %v593, %v616
        %v618 = vrot.slane %v617, 2
        %v619 = vadd.f32 %v617, %v618
        %v620 = vrot.slane %v619, 1
        %v621 = vadd.f32 %v619, %v620
        %v622 = vrot.slane %v594, 4
        %v623 = vadd.f32 %v594, %v622
        %v624 = vrot.slane %v623, 2
        %v625 = vadd.f32 %v623, %v624
        %v626 = vrot.slane %v625, 1
        %v627 = vadd.f32 %v625, %v626
        %v628 = vrot.slane %v595, 4
        %v629 = vadd.f32 %v595, %v628
        %v630 = vrot.slane %v629, 2
        %v631 = vadd.f32 %v629, %v630
        %v632 = vrot.slane %v631, 1
        %v633 = vadd.f32 %v631, %v632
        %v634 = vrot.slane %v596, 4
        %v635 = vadd.f32 %v596, %v634
        %v636 = vrot.slane %v635, 2
        %v637 = vadd.f32 %v635, %v636
        %v638 = vrot.slane %v637, 1
        %v639 = vadd.f32 %v637, %v638
        %v640 = vrot.slane %v597, 4
        %v641 = vadd.f32 %v597, %v640
        %v642 = vrot.slane %v641, 2
        %v643 = vadd.f32 %v641, %v642
        %v644 = vrot.slane %v643, 1
        %v645 = vadd.f32 %v643, %v644
        %v647 = vrot.slane %v579, 1
        %v648 = vrot.slane %v579, 2
        %v649 = vrot.slane %v579, 3
        %v650 = vrot.slane %v579, 4
        %v651 = vrot.slane %v579, 5
        %v652 = vrot.slane %v579, 6
        %v653 = vrot.slane %v579, 7
        %v662 = vmul.f32 %v603, %v579
        %v663 = vmul.f32 %v609, %v647
        %v664 = vmul.f32 %v615, %v648
        %v665 = vmul.f32 %v621, %v649
        %v666 = vmul.f32 %v627, %v650
        %v667 = vmul.f32 %v633, %v651
        %v668 = vmul.f32 %v639, %v652
        %v669 = vmul.f32 %v645, %v653
        %v678 = vrot.slane %v663, 7
        %vm679 = vcmask 1041409
        %v680 = vsel %vm679, %v678, %v662
        %v681 = vrot.slane %v664, 6
        %vm682 = vcmask 1042434
        %v683 = vsel %vm682, %v681, %v680
        %v684 = vrot.slane %v665, 5
        %vm685 = vcmask 1043459
        %v686 = vsel %vm685, %v684, %v683
        %v687 = vrot.slane %v666, 4
        %vm688 = vcmask 1044484
        %v689 = vsel %vm688, %v687, %v686
        %v690 = vrot.slane %v667, 3
        %vm691 = vcmask 1045509
        %v692 = vsel %vm691, %v690, %v689
        %v693 = vrot.slane %v668, 2
        %vm694 = vcmask 1046534
        %v695 = vsel %vm694, %v693, %v692
        %v696 = vrot.slane %v669, 1
        %vm697 = vcmask 1047559
        %v698 = vsel %vm697, %v696, %v695
        %v700 = vrot.slane %v698, 4
        %v701 = vadd.f32 %v698, %v700
        %v702 = vrot.slane %v701, 2
        %v703 = vadd.f32 %v701, %v702
        %v704 = vrot.slane %v703, 1
        %v705 = vadd.f32 %v703, %v704
        %v706 = vmul.f32 %v581, %v580
        %v707 = vmul.f32 %v582, %v580
        %v708 = vmul.f32 %v583, %v580
        %v709 = vmul.f32 %v584, %v580
        %v710 = vmul.f32 %v585, %v580
        %v711 = vmul.f32 %v586, %v580
        %v712 = vmul.f32 %v587, %v580
        %v713 = vmul.f32 %v588, %v580
        %v714 = vrot.slane %v706, 4
        %v715 = vadd.f32 %v706, %v714
        %v716 = vrot.slane %v715, 2
        %v717 = vadd.f32 %v715, %v716
        %v718 = vrot.slane %v717, 1
        %v719 = vadd.f32 %v717, %v718
        %v720 = vrot.slane %v707, 4
        %v721 = vadd.f32 %v707, %v720
        %v722 = vrot.slane %v721, 2
        %v723 = vadd.f32 %v721, %v722
        %v724 = vrot.slane %v723, 1
        %v725 = vadd.f32 %v723, %v724
        %v726 = vrot.slane %v708, 4
        %v727 = vadd.f32 %v708, %v726
        %v728 = vrot.slane %v727, 2
        %v729 = vadd.f32 %v727, %v728
        %v730 = vrot.slane %v729, 1
        %v731 = vadd.f32 %v729, %v730
        %v732 = vrot.slane %v709, 4
        %v733 = vadd.f32 %v709, %v732
        %v734 = vrot.slane %v733, 2
        %v735 = vadd.f32 %v733, %v734
        %v736 = vrot.slane %v735, 1
        %v737 = vadd.f32 %v735, %v736
        %v738 = vrot.slane %v710, 4
        %v739 = vadd.f32 %v710, %v738
        %v740 = vrot.slane %v739, 2
        %v741 = vadd.f32 %v739, %v740
        %v742 = vrot.slane %v741, 1
        %v743 = vadd.f32 %v741, %v742
        %v744 = vrot.slane %v711, 4
        %v745 = vadd.f32 %v711, %v744
        %v746 = vrot.slane %v745, 2
        %v747 = vadd.f32 %v745, %v746
        %v748 = vrot.slane %v747, 1
        %v749 = vadd.f32 %v747, %v748
        %v750 = vrot.slane %v712, 4
        %v751 = vadd.f32 %v712, %v750
        %v752 = vrot.slane %v751, 2
        %v753 = vadd.f32 %v751, %v752
        %v754 = vrot.slane %v753, 1
        %v755 = vadd.f32 %v753, %v754
        %v756 = vrot.slane %v713, 4
        %v757 = vadd.f32 %v713, %v756
        %v758 = vrot.slane %v757, 2
        %v759 = vadd.f32 %v757, %v758
        %v760 = vrot.slane %v759, 1
        %v761 = vadd.f32 %v759, %v760
        %v763 = vrot.slane %v589, 1
        %v764 = vrot.slane %v589, 2
        %v765 = vrot.slane %v589, 3
        %v766 = vrot.slane %v589, 4
        %v767 = vrot.slane %v589, 5
        %v768 = vrot.slane %v589, 6
        %v769 = vrot.slane %v589, 7
        %v778 = vmul.f32 %v719, %v589
        %v779 = vmul.f32 %v725, %v763
        %v780 = vmul.f32 %v731, %v764
        %v781 = vmul.f32 %v737, %v765
        %v782 = vmul.f32 %v743, %v766
        %v783 = vmul.f32 %v749, %v767
        %v784 = vmul.f32 %v755, %v768
        %v785 = vmul.f32 %v761, %v769
        %v794 = vrot.slane %v779, 7
        %v795 = vsel %vm679, %v794, %v778
        %v796 = vrot.slane %v780, 6
        %v797 = vsel %vm682, %v796, %v795
        %v798 = vrot.slane %v781, 5
        %v799 = vsel %vm685, %v798, %v797
        %v800 = vrot.slane %v782, 4
        %v801 = vsel %vm688, %v800, %v799
        %v802 = vrot.slane %v783, 3
        %v803 = vsel %vm691, %v802, %v801
        %v804 = vrot.slane %v784, 2
        %v805 = vsel %vm694, %v804, %v803
        %v806 = vrot.slane %v785, 1
        %v807 = vsel %vm697, %v806, %v805
        %v809 = vrot.slane %v807, 4
        %v810 = vadd.f32 %v807, %v809
        %v811 = vrot.slane %v810, 2
        %v812 = vadd.f32 %v810, %v811
        %v813 = vrot.slane %v812, 1
        %v814 = vadd.f32 %v812, %v813
        %v815 = vand.u32 2147483647, %v814
        %vm816 = vcmp.lt.f32.partialorder %v815, 0.3
        %v817 = vsel %vm816, 1, 0
        %v818 = vcvt.s32.f32 %v817
        %v819 = vmul.f32 %v705, %v818
        %v820 = vsub.f32 1.0, %v818
        %v821 = vmul.f32 %v814, %v820
        %v822 = vadd.f32 %v819, %v821
        %823 = vst [vmem:[%s133] sm:$0x1] %v822
        %s824 = sand.u32 %s71, 1
        %s825 = scalar_lea.sflag [#allocation3], %s824
        %s826 = sand.u32 %s71, 1
        %s827 = scalar_lea.vmem [#allocation2], %s826
        // Predicated region
        $region29: #{tpu_custom_call.1} parent=27 // pred_check
          %p828 = pneg %p81
        $region30: #{tpu_custom_call.1} parent=27 // pred_check_branch
          %830 = sbr.rel (%p828) target = $region32
        $region31: #{tpu_custom_call.1} parent=27 // pred_region
          %s832 = ssub.s32 16, 16
          %833 = vsyncadd %s825, %s832
          %s834 = smul.addr %s16, 16
          %s835 = scalar_lea.hbm %s2, %s834
          %s837 = sshll.u32 %s827, 4
          %s838 = int_to_ptr.vmem [resolvable:$true] %s837
          %840 = dma.vmem_to_hbm [thread:$0]  %s838, 16, %s835, %s825
        $region32: #{tpu_custom_call.1} parent=27 // pred_fallthru
          _
      $region28: #{tpu_custom_call.1} parent=5 // pred_fallthru
        _
      %p841 = scmp.le.s32.totalorder 2, %s11
      // Predicated region
      $region33: #{tpu_custom_call.1} parent=5 // pred_check
        %p842 = pneg %p841
      $region34: #{tpu_custom_call.1} parent=5 // pred_check_branch
        %844 = sbr.rel (%p842) target = $region36
      $region35: #{tpu_custom_call.1} parent=5 // pred_region
        %s845 = ssub.s32 %s11, 2
        // Predicated region
        $region37: #{tpu_custom_call.1} parent=35 // pred_check
          %p846 = pneg %p87
        $region38: #{tpu_custom_call.1} parent=35 // pred_check_branch
          %848 = sbr.rel (%p846) target = $region40
        $region39: #{tpu_custom_call.1} parent=35 // pred_region
          %s849 = sand.u32 %s72, 1
          %s850 = scalar_lea.sflag [#allocation3], %s849
          %s851 = sand.u32 %s72, 1
          %s852 = scalar_lea.vmem [#allocation2], %s851
          %853 = dma.done %s850, 16
        $region40: #{tpu_custom_call.1} parent=35 // pred_fallthru
          _
      $region36: #{tpu_custom_call.1} parent=5 // pred_fallthru
        _
    $region6: #{tpu_custom_call.1} parent=1 // loop_footer
      %s15 = sadd.s32 1, %s11
    $region7: #{tpu_custom_call.1} parent=1 // loop_footer_branch
      %10 = sbr.rel target = $region3
    $region8: #{tpu_custom_call.1} parent=1 // loop_exit
      _
    %854 = vsyncpa [#allocation3], 1
    %s855 = scalar_lea.sflag [#allocation3], 1
    %856 = vsyncpa %s855, 1

</llo_original>
